<compile_context>
chip_gen: v7x
topology: tpu7x:2x2x1
jax: 0.10.0
libtpu: 0.0.40
codegen_flags: <defaults>
</compile_context>

<pallas_src>
import jax
import jax.numpy as jnp
from jax.experimental import pallas as pl
from jax.experimental.pallas import tpu as pltpu


def _round_up(x, m):
    return ((x + m - 1) // m) * m


def _tile_policy():
    """Generation-gated VMEM sizing.

    Returns (per_x_tile_budget_bytes, scoped_vmem_limit_bytes, min_grid_steps).
    """
    try:
        vmem_bytes = pltpu.get_tpu_info().vmem_capacity_bytes
    except Exception:  # query unavailable -> conservative defaults
        vmem_bytes = None
    if vmem_bytes is not None and vmem_bytes >= (96 << 20):
        # v5e / v6e class (128 MiB VMEM): go big to amortize per-step overhead.
        return (8 << 20), (96 << 20), 1
    if vmem_bytes is not None:
        # v7x class (64 MiB physical VMEM): smaller tiles, keep total scoped
        # VMEM well under the physical cap, and force >=2 grid steps so the
        # "parallel" batch axis can shard across both TensorCores.
        return (3 << 20), (48 << 20), 2
    # Unknown backend: safe on every generation.
    return (2 << 20), (32 << 20), 1


def _pick_batch_tile(b, bytes_per_row, per_tile_budget, min_steps):
    """Largest 8-aligned batch tile within the per-x-tile VMEM budget.

    If b <= 8 the whole batch is one tile (the block equals the full batch
    dim, so the sublane-alignment rule on the 2-D output blocks still holds).
    A cdiv grid handles the (masked) partial last tile when tb does not
    divide b, so there is no 'tb must divide b' fallback any more.
    """
    if b <= 8:
        return b
    tb = max(8, (per_tile_budget // bytes_per_row) // 8 * 8)
    tb = min(tb, (b // 8) * 8)
    if min_steps >= 2:
        # Guarantee at least two grid steps (dual-TensorCore sharding on v7x).
        tb = min(tb, max(8, ((b - 1) // 8) * 8))
    return tb


def _dannet_kernel(src_ref, tgt_ref, wb_ref, bb_ref, alpha_ref,
                   wfc_ref, bfc_ref, feat_s_ref, feat_t_ref,
                   cls_s_ref, cls_t_ref):
    # src_ref/tgt_ref: (tb, C, HW) f32 image tiles, spatial flattened on lanes
    # wb_ref:          (C, hidden_pad) f32, pre-scaled by 1/HW (mean folded)
    # bb_ref:          (1, hidden_pad) f32
    # alpha_ref:       (1,) f32 in SMEM  (shared PReLU slope)
    # wfc_ref:         (hidden_pad, cls_pad) f32
    # bfc_ref:         (1, cls_pad) f32
    tb = src_ref.shape[0]
    alpha = alpha_ref[0]

    # Backbone stand-in: global average pool (the 1/HW scale is folded into
    # wb, so this is a plain sum straight off the f32 tile -- no upcast copy).
    pooled_s = jnp.sum(src_ref[...], axis=2)                 # (tb, C) f32
    pooled_t = jnp.sum(tgt_ref[...], axis=2)                 # (tb, C) f32

    # Fuse the source/target heads: one matmul per layer over 2*tb rows.
    pooled = jnp.concatenate([pooled_s, pooled_t], axis=0)   # (2*tb, C)
    pre = jnp.dot(pooled, wb_ref[...],
                  preferred_element_type=jnp.float32) + bb_ref[...]
    # x.view(N, -1) is a no-op here (already 2-D); then PReLU.
    feature = jnp.where(pre >= 0.0, pre, alpha * pre)        # (2*tb, Hp)
    # cls = self.fc(feature); padded feature columns are exactly zero so the
    # weight padding contributes nothing.
    cls = jnp.dot(feature, wfc_ref[...],
                  preferred_element_type=jnp.float32) + bfc_ref[...]

    feat_s_ref[...] = feature[:tb]
    feat_t_ref[...] = feature[tb:]
    cls_s_ref[...] = cls[:tb]
    cls_t_ref[...] = cls[tb:]


def dannet_forward(source, target, params):
    """Mirrors DANNet.forward: returns (source_feature, target_feature,
    source_cls, target_cls).  source/target: (b, C, H, W) like PyTorch."""
    assert source.shape == target.shape, "source/target must share a shape"
    b, C, H, W = source.shape
    HW = H * W
    wb, bb, alpha, wfc, bfc = params
    hidden = wb.shape[1]
    num_class = wfc.shape[1]
    hidden_pad = _round_up(hidden, 128)
    cls_pad = _round_up(num_class, 128)

    # No wrapper-side cast/transpose of the dominant tensors: the reshape to
    # (b, C, HW) is metadata-only and the kernel consumes f32 directly.
    src = source.reshape(b, C, HW)
    tgt = target.reshape(b, C, HW)

    # Fold the 1/HW mean scale into wb; pad weights/biases to lane-dense
    # widths (these are small relative to x, so the host-side prep is cheap).
    wb_k = jnp.zeros((C, hidden_pad), jnp.float32).at[:, :hidden].set(wb / HW)
    bb_k = jnp.zeros((1, hidden_pad), jnp.float32).at[0, :hidden].set(bb)
    wfc_k = jnp.zeros((hidden_pad, cls_pad),
                      jnp.float32).at[:hidden, :num_class].set(wfc)
    bfc_k = jnp.zeros((1, cls_pad), jnp.float32).at[0, :num_class].set(bfc)
    alpha_k = jnp.reshape(alpha, (1,)).astype(jnp.float32)

    per_tile_budget, vmem_limit, min_steps = _tile_policy()
    tb = _pick_batch_tile(b, C * HW * 4, per_tile_budget, min_steps)
    nt = pl.cdiv(b, tb)

    vmem = pltpu.MemorySpace.VMEM
    smem = pltpu.MemorySpace.SMEM
    x_spec = pl.BlockSpec((tb, C, HW), lambda i: (i, 0, 0), memory_space=vmem)

    def w_spec(shape):
        # Grid-invariant blocks (same index every step).  If VMEM ever gets
        # tight (v7x + resnet-sized weights) add pipeline_mode=pl.Buffered(1)
        # here to drop their second pipeline buffer.
        return pl.BlockSpec(shape, lambda i: (0, 0), memory_space=vmem)

    feat_spec = pl.BlockSpec((tb, hidden_pad), lambda i: (i, 0),
                             memory_space=vmem)
    cls_spec = pl.BlockSpec((tb, cls_pad), lambda i: (i, 0),
                            memory_space=vmem)

    feat_s, feat_t, cls_s, cls_t = pl.pallas_call(
        _dannet_kernel,
        grid=(nt,),
        in_specs=[
            x_spec,                           # source tiles (f32)
            x_spec,                           # target tiles (f32)
            w_spec((C, hidden_pad)),          # backbone projection (1/HW folded)
            w_spec((1, hidden_pad)),          # backbone bias
            pl.BlockSpec(memory_space=smem),  # PReLU slope (scalar, SMEM)
            w_spec((hidden_pad, cls_pad)),    # fc weight
            w_spec((1, cls_pad)),             # fc bias
        ],
        out_specs=(feat_spec, feat_spec, cls_spec, cls_spec),
        out_shape=(
            jax.ShapeDtypeStruct((b, hidden_pad), jnp.float32),
            jax.ShapeDtypeStruct((b, hidden_pad), jnp.float32),
            jax.ShapeDtypeStruct((b, cls_pad), jnp.float32),
            jax.ShapeDtypeStruct((b, cls_pad), jnp.float32),
        ),
        compiler_params=pltpu.CompilerParams(
            dimension_semantics=("parallel",),   # batch tiles are independent
            vmem_limit_bytes=vmem_limit,
        ),
    )(src, tgt, wb_k, bb_k, alpha_k, wfc_k, bfc_k)

    source_feature = feat_s[:, :hidden]
    target_feature = feat_t[:, :hidden]
    source_cls = cls_s[:, :num_class]
    target_cls = cls_t[:, :num_class]
    return source_feature, target_feature, source_cls, target_cls


def init_params(key, in_channels, hidden_size, num_class):
    k1, k2, k3, k4 = jax.random.split(key, 4)
    # synthetic backbone projection (stand-in for the pretrained conv stack)
    wb = jax.random.normal(k1, (in_channels, hidden_size), jnp.float32) * 0.1
    bb = jax.random.normal(k2, (hidden_size,), jnp.float32) * 0.01
    # nn.PReLU() default: single shared parameter, init 0.25
    alpha = jnp.float32(0.25)
    # nn.Linear(hidden_size, num_class): torch weight is (out, in) -> transpose
    wfc_torch = jax.random.normal(k3, (num_class, hidden_size), jnp.float32) * 0.1
    wfc = wfc_torch.T
    bfc = jax.random.normal(k4, (num_class,), jnp.float32) * 0.01
    return (wb, bb, alpha, wfc, bfc)


def _reference(source, target, params):
    """Pure-JAX f32 reference mirroring the kernel's math exactly."""
    wb, bb, alpha, wfc, bfc = params
    b, C, H, W = source.shape
    HW = H * W
    x = jnp.concatenate([source, target], axis=0).reshape(2 * b, C, HW)
    pooled = jnp.sum(x, axis=-1)
    pre = jnp.dot(pooled, wb / HW,
                  preferred_element_type=jnp.float32) + bb[None, :]
    feat = jnp.where(pre >= 0.0, pre, alpha * pre)
    cls = jnp.dot(feat, wfc, preferred_element_type=jnp.float32) + bfc[None, :]
    return feat, cls


if __name__ == "__main__":
    key = jax.random.PRNGKey(0)
    k_src, k_tgt, k_par = jax.random.split(key, 3)

    batch = 2
    in_channels = 4
    spatial = 16
    hidden_size = 32
    num_class = 8

    source = jax.random.normal(
        k_src, (batch, in_channels, spatial, spatial), jnp.float32)
    target = jax.random.normal(
        k_tgt, (batch, in_channels, spatial, spatial), jnp.float32)
    params = init_params(k_par, in_channels, hidden_size, num_class)

    outs = dannet_forward(source, target, params)
    jax.block_until_ready(outs)
    src_feat, tgt_feat, src_cls, tgt_cls = outs

    assert src_feat.shape == (batch, hidden_size)
    assert tgt_feat.shape == (batch, hidden_size)
    assert src_cls.shape == (batch, num_class)
    assert tgt_cls.shape == (batch, num_class)

    feat_ref, cls_ref = _reference(source, target, params)
    feat = jnp.concatenate([src_feat, tgt_feat], axis=0)
    cls = jnp.concatenate([src_cls, tgt_cls], axis=0)
    assert jnp.allclose(feat, feat_ref, atol=2e-3, rtol=2e-3)
    assert jnp.allclose(cls, cls_ref, atol=2e-3, rtol=2e-3)

    print("KERNEL_OK")
</pallas_src>

<mosaic_0001>
module attributes {stable_mosaic.version = 11 : i64} {
  func.func @_dannet_kernel(%arg0: i32, %arg1: memref<2x4x256xf32, #tpu.memory_space<vmem>>, %arg2: memref<2x4x256xf32, #tpu.memory_space<vmem>>, %arg3: memref<4x128xf32, #tpu.memory_space<vmem>>, %arg4: memref<1x128xf32, #tpu.memory_space<vmem>>, %arg5: memref<1xf32, #tpu.memory_space<smem>>, %arg6: memref<128x128xf32, #tpu.memory_space<vmem>>, %arg7: memref<1x128xf32, #tpu.memory_space<vmem>>, %arg8: memref<2x128xf32, #tpu.memory_space<vmem>>, %arg9: memref<2x128xf32, #tpu.memory_space<vmem>>, %arg10: memref<2x128xf32, #tpu.memory_space<vmem>>, %arg11: memref<2x128xf32, #tpu.memory_space<vmem>>) attributes {dimension_semantics = [#tpu.dimension_semantics<parallel>], iteration_bounds = array<i64: 1>, scalar_prefetch = 0 : i64, scratch_operands = 0 : i64, tpu.core_type = #tpu.core_type<tc>, window_params = [{transform_indices = @transform_0, window_bounds = array<i64: 2, 4, 256>}, {transform_indices = @transform_1, window_bounds = array<i64: 2, 4, 256>}, {pipeline_mode = #tpu.pipeline_mode<synchronous>, transform_indices = @transform_2, window_bounds = array<i64: 4, 128>}, {pipeline_mode = #tpu.pipeline_mode<synchronous>, transform_indices = @transform_3, window_bounds = array<i64: 1, 128>}, {transform_indices = @transform_4, window_bounds = array<i64: 1>}, {pipeline_mode = #tpu.pipeline_mode<synchronous>, transform_indices = @transform_5, window_bounds = array<i64: 128, 128>}, {pipeline_mode = #tpu.pipeline_mode<synchronous>, transform_indices = @transform_6, window_bounds = array<i64: 1, 128>}, {transform_indices = @transform_7, window_bounds = array<i64: 2, 128>}, {transform_indices = @transform_8, window_bounds = array<i64: 2, 128>}, {transform_indices = @transform_9, window_bounds = array<i64: 2, 128>}, {transform_indices = @transform_10, window_bounds = array<i64: 2, 128>}]} {
    %c0 = arith.constant 0 : index
    %0 = memref.load %arg5[%c0] : memref<1xf32, #tpu.memory_space<smem>>
    %c0_0 = arith.constant 0 : index
    %c0_1 = arith.constant 0 : index
    %c0_2 = arith.constant 0 : index
    %1 = vector.load %arg1[%c0_0, %c0_1, %c0_2] : memref<2x4x256xf32, #tpu.memory_space<vmem>>, vector<2x4x256xf32>
    %cst = arith.constant dense<0.000000e+00> : vector<2x4xf32>
    %2 = vector.multi_reduction <add>, %1, %cst [2] : vector<2x4x256xf32> to vector<2x4xf32>
    %c0_3 = arith.constant 0 : index
    %c0_4 = arith.constant 0 : index
    %c0_5 = arith.constant 0 : index
    %3 = vector.load %arg2[%c0_3, %c0_4, %c0_5] : memref<2x4x256xf32, #tpu.memory_space<vmem>>, vector<2x4x256xf32>
    %cst_6 = arith.constant dense<0.000000e+00> : vector<2x4xf32>
    %4 = vector.multi_reduction <add>, %3, %cst_6 [2] : vector<2x4x256xf32> to vector<2x4xf32>
    %5 = tpu.concatenate %2, %4 in 0 : vector<2x4xf32>, vector<2x4xf32> -> vector<4x4xf32>
    %c0_7 = arith.constant 0 : index
    %c0_8 = arith.constant 0 : index
    %6 = vector.load %arg3[%c0_7, %c0_8] : memref<4x128xf32, #tpu.memory_space<vmem>>, vector<4x128xf32>
    %cst_9 = arith.constant dense<0.000000e+00> : vector<4x128xf32>
    %7 = tpu.matmul %5, %6, %cst_9 {dimension_numbers = #tpu.dot_dimension_numbers<[1], [0], [0], [1], [0, 0, 1, 1], [], []>} : vector<4x4xf32>, vector<4x128xf32>, vector<4x128xf32> -> vector<4x128xf32>
    %c0_10 = arith.constant 0 : index
    %c0_11 = arith.constant 0 : index
    %8 = vector.load %arg4[%c0_10, %c0_11] : memref<1x128xf32, #tpu.memory_space<vmem>>, vector<1x128xf32>
    %9 = vector.broadcast %8 : vector<1x128xf32> to vector<4x128xf32>
    %10 = arith.addf %7, %9 : vector<4x128xf32>
    %cst_12 = arith.constant 0.000000e+00 : f32
    %11 = vector.broadcast %cst_12 : f32 to vector<4x128xf32>
    %12 = arith.cmpf oge, %10, %11 : vector<4x128xf32>
    %13 = vector.broadcast %0 : f32 to vector<4x128xf32>
    %14 = arith.mulf %13, %10 : vector<4x128xf32>
    %15 = arith.select %12, %10, %14 : vector<4x128xi1>, vector<4x128xf32>
    %c0_13 = arith.constant 0 : index
    %c0_14 = arith.constant 0 : index
    %16 = vector.load %arg6[%c0_13, %c0_14] : memref<128x128xf32, #tpu.memory_space<vmem>>, vector<128x128xf32>
    %cst_15 = arith.constant dense<0.000000e+00> : vector<4x128xf32>
    %17 = tpu.matmul %15, %16, %cst_15 {dimension_numbers = #tpu.dot_dimension_numbers<[1], [0], [0], [1], [0, 0, 1, 1], [], []>} : vector<4x128xf32>, vector<128x128xf32>, vector<4x128xf32> -> vector<4x128xf32>
    %c0_16 = arith.constant 0 : index
    %c0_17 = arith.constant 0 : index
    %18 = vector.load %arg7[%c0_16, %c0_17] : memref<1x128xf32, #tpu.memory_space<vmem>>, vector<1x128xf32>
    %19 = vector.broadcast %18 : vector<1x128xf32> to vector<4x128xf32>
    %20 = arith.addf %17, %19 : vector<4x128xf32>
    %21 = vector.extract_strided_slice %15 {offsets = [0, 0], sizes = [2, 128], strides = [1, 1]} : vector<4x128xf32> to vector<2x128xf32>
    %c0_18 = arith.constant 0 : index
    %c0_19 = arith.constant 0 : index
    %22 = vector.load %arg8[%c0_18, %c0_19] : memref<2x128xf32, #tpu.memory_space<vmem>>, vector<2x128xf32>
    tpu.vector_store %arg8[%c0_18, %c0_19], %21 {strides = array<i32>} : memref<2x128xf32, #tpu.memory_space<vmem>>, vector<2x128xf32>,
    %23 = vector.extract_strided_slice %15 {offsets = [2, 0], sizes = [2, 128], strides = [1, 1]} : vector<4x128xf32> to vector<2x128xf32>
    %c0_20 = arith.constant 0 : index
    %c0_21 = arith.constant 0 : index
    %24 = vector.load %arg9[%c0_20, %c0_21] : memref<2x128xf32, #tpu.memory_space<vmem>>, vector<2x128xf32>
    tpu.vector_store %arg9[%c0_20, %c0_21], %23 {strides = array<i32>} : memref<2x128xf32, #tpu.memory_space<vmem>>, vector<2x128xf32>,
    %25 = vector.extract_strided_slice %20 {offsets = [0, 0], sizes = [2, 128], strides = [1, 1]} : vector<4x128xf32> to vector<2x128xf32>
    %c0_22 = arith.constant 0 : index
    %c0_23 = arith.constant 0 : index
    %26 = vector.load %arg10[%c0_22, %c0_23] : memref<2x128xf32, #tpu.memory_space<vmem>>, vector<2x128xf32>
    tpu.vector_store %arg10[%c0_22, %c0_23], %25 {strides = array<i32>} : memref<2x128xf32, #tpu.memory_space<vmem>>, vector<2x128xf32>,
    %27 = vector.extract_strided_slice %20 {offsets = [2, 0], sizes = [2, 128], strides = [1, 1]} : vector<4x128xf32> to vector<2x128xf32>
    %c0_24 = arith.constant 0 : index
    %c0_25 = arith.constant 0 : index
    %28 = vector.load %arg11[%c0_24, %c0_25] : memref<2x128xf32, #tpu.memory_space<vmem>>, vector<2x128xf32>
    tpu.vector_store %arg11[%c0_24, %c0_25], %27 {strides = array<i32>} : memref<2x128xf32, #tpu.memory_space<vmem>>, vector<2x128xf32>,
    return
  }
  func.func @transform_0(%arg0: i32) -> (i32, i32, i32) {
    %c0_i32 = arith.constant 0 : i32
    %c0_i32_0 = arith.constant 0 : i32
    %c0_i32_1 = arith.constant 0 : i32
    return %arg0, %c0_i32, %c0_i32_0 : i32, i32, i32
  }
  func.func @transform_1(%arg0: i32) -> (i32, i32, i32) {
    %c0_i32 = arith.constant 0 : i32
    %c0_i32_0 = arith.constant 0 : i32
    %c0_i32_1 = arith.constant 0 : i32
    return %arg0, %c0_i32, %c0_i32_0 : i32, i32, i32
  }
  func.func @transform_2(%arg0: i32) -> (i32, i32) {
    %c0_i32 = arith.constant 0 : i32
    %c0_i32_0 = arith.constant 0 : i32
    %c0_i32_1 = arith.constant 0 : i32
    return %c0_i32, %c0_i32_0 : i32, i32
  }
  func.func @transform_3(%arg0: i32) -> (i32, i32) {
    %c0_i32 = arith.constant 0 : i32
    %c0_i32_0 = arith.constant 0 : i32
    %c0_i32_1 = arith.constant 0 : i32
    return %c0_i32, %c0_i32_0 : i32, i32
  }
  func.func @transform_4(%arg0: i32) -> i32 {
    %c0_i32 = arith.constant 0 : i32
    %c0_i32_0 = arith.constant 0 : i32
    return %c0_i32 : i32
  }
  func.func @transform_5(%arg0: i32) -> (i32, i32) {
    %c0_i32 = arith.constant 0 : i32
    %c0_i32_0 = arith.constant 0 : i32
    %c0_i32_1 = arith.constant 0 : i32
    return %c0_i32, %c0_i32_0 : i32, i32
  }
  func.func @transform_6(%arg0: i32) -> (i32, i32) {
    %c0_i32 = arith.constant 0 : i32
    %c0_i32_0 = arith.constant 0 : i32
    %c0_i32_1 = arith.constant 0 : i32
    return %c0_i32, %c0_i32_0 : i32, i32
  }
  func.func @transform_7(%arg0: i32) -> (i32, i32) {
    %c0_i32 = arith.constant 0 : i32
    %c0_i32_0 = arith.constant 0 : i32
    return %arg0, %c0_i32 : i32, i32
  }
  func.func @transform_8(%arg0: i32) -> (i32, i32) {
    %c0_i32 = arith.constant 0 : i32
    %c0_i32_0 = arith.constant 0 : i32
    return %arg0, %c0_i32 : i32, i32
  }
  func.func @transform_9(%arg0: i32) -> (i32, i32) {
    %c0_i32 = arith.constant 0 : i32
    %c0_i32_0 = arith.constant 0 : i32
    return %arg0, %c0_i32 : i32, i32
  }
  func.func @transform_10(%arg0: i32) -> (i32, i32) {
    %c0_i32 = arith.constant 0 : i32
    %c0_i32_0 = arith.constant 0 : i32
    return %arg0, %c0_i32 : i32, i32
  }
}

</mosaic_0001>

<llo_original>
// kernel: tpu_custom_call.1
$region0: #{tpu_custom_call.1}
  #allocation0 [shape = 'u32[]', space=smem, size = 0x4, offset = 0x4, fixed_abs, tag = 'smem constant byte address 0x4 - core index']
  #allocation1 [shape = 'u32[144,128]{1,0:T(1,128)}', space=vmem, size = 0x12000, scoped, tag = 'internal scratch']
  #allocation2 [shape = 'f32[1]{0:T(128)S(6)}', space=smem, size = 0x200, scoped, tag = 'scoped memory for tpu_custom_call.1']
  %s0 = inlined_call_operand.hbm [shape: f32[2,4,256], index: 0, kind: input, shape index: {}]
  %s1 = inlined_call_operand.hbm [shape: f32[2,4,256], index: 1, kind: input, shape index: {}]
  %s2 = inlined_call_operand.vmem [shape: f32[4,128], index: 2, kind: input, shape index: {}]
  %s3 = inlined_call_operand.vmem [shape: f32[1,128], index: 3, kind: input, shape index: {}]
  %s4 = inlined_call_operand.<no memory space> [shape: f32[1], index: 4, kind: input, shape index: {}]
  %s5 = inlined_call_operand.hbm [shape: f32[128,128], index: 5, kind: input, shape index: {}]
  %s6 = inlined_call_operand.vmem [shape: f32[1,128], index: 6, kind: input, shape index: {}]
  %s7 = inlined_call_operand.hbm [shape: f32[2,128], index: 7, kind: output, shape index: {0}]
  %s8 = inlined_call_operand.hbm [shape: f32[2,128], index: 8, kind: output, shape index: {1}]
  %s9 = inlined_call_operand.hbm [shape: f32[2,128], index: 9, kind: output, shape index: {2}]
  %s10 = inlined_call_operand.hbm [shape: f32[2,128], index: 10, kind: output, shape index: {3}]
  %11 = xla_tuple %s7, %s8, %s9, %s10
  %s12 = sld [smem:[#allocation0]]
  $region74: #{tpu_custom_call.1} parent=0
    _
  %s14 = ssub.s32 1, %s12
  %s15 = scalar_select 0, %s14, %s12
  %16 = sst [smem:[#allocation2]] %s4
  $region1: #{tpu_custom_call.1} parent=0
    #allocation3 [shape = 'u8[8192]{0}', space=vmem, size = 0x2000, scoped, tag = 'input window, operand 0, single buffered']
    #allocation4 [shape = 's32[1]{0}', space=sflag, size = 0x4, scoped, tag = 'scoped memory for tpu_custom_call.1']
    #allocation5 [shape = 's32[1]{0}', space=sflag, size = 0x4, scoped, tag = 'scoped memory for tpu_custom_call.1']
    #allocation6 [shape = 'u8[8192]{0}', space=vmem, size = 0x2000, scoped, tag = 'input window, operand 1, single buffered']
    #allocation7 [shape = 's32[1]{0}', space=sflag, size = 0x4, scoped, tag = 'scoped memory for tpu_custom_call.1']
    #allocation8 [shape = 'u8[65536]{0}', space=vmem, size = 0x10000, scoped, tag = 'input window, operand 5, single buffered']
    #allocation9 [shape = 'u8[1024]{0}', space=vmem, size = 0x400, scoped, tag = 'output window, operand 0, single buffered']
    #allocation10 [shape = 'u8[1024]{0}', space=vmem, size = 0x400, scoped, tag = 'output window, operand 1, single buffered']
    #allocation11 [shape = 's32[1]{0}', space=sflag, size = 0x4, scoped, tag = 'scoped memory for tpu_custom_call.1']
    #allocation12 [shape = 'u8[1024]{0}', space=vmem, size = 0x400, scoped, tag = 'output window, operand 2, single buffered']
    #allocation13 [shape = 'u8[1024]{0}', space=vmem, size = 0x400, scoped, tag = 'output window, operand 3, single buffered']
    #allocation14 [shape = 's32[1]{0}', space=sflag, size = 0x4, scoped, tag = 'scoped memory for tpu_custom_call.1']
    %17 = vsyncpa [#allocation4], 0
    %18 = vsyncpa [#allocation7], 0
    %19 = vsyncpa [#allocation5], 0
    %20 = vsyncpa [#allocation11], 0
    %21 = vsyncpa [#allocation14], 0
    // Predicated region
    $region2: #{tpu_custom_call.1} parent=1 // pred_check
      _
    $region3: #{tpu_custom_call.1} parent=1 // pred_check_branch
      %23 = sbr.rel (0) target = $region5
    $region4: #{tpu_custom_call.1} parent=1 // pred_region
      %s25 = ssub.s32 256, 256
      %26 = vsyncadd [#allocation4], %s25
      %s27 = sshll.u32 [#allocation3], 4
      %s28 = int_to_ptr.vmem [resolvable:$true] %s27
      %33 = dma.hbm_to_vmem [thread:$0]  %s0, 256, %s28, [#allocation4], 128, 128, 8
    $region5: #{tpu_custom_call.1} parent=1 // pred_fallthru
      _
    // Predicated region
    $region6: #{tpu_custom_call.1} parent=1 // pred_check
      _
    $region7: #{tpu_custom_call.1} parent=1 // pred_check_branch
      %35 = sbr.rel (0) target = $region9
    $region8: #{tpu_custom_call.1} parent=1 // pred_region
      %s37 = ssub.s32 256, 256
      %38 = vsyncadd [#allocation7], %s37
      %s39 = sshll.u32 [#allocation6], 4
      %s40 = int_to_ptr.vmem [resolvable:$true] %s39
      %45 = dma.hbm_to_vmem [thread:$0]  %s1, 256, %s40, [#allocation7], 128, 128, 8
    $region9: #{tpu_custom_call.1} parent=1 // pred_fallthru
      _
    // Predicated region
    $region10: #{tpu_custom_call.1} parent=1 // pred_check
      _
    $region11: #{tpu_custom_call.1} parent=1 // pred_check_branch
      %47 = sbr.rel (0) target = $region13
    $region12: #{tpu_custom_call.1} parent=1 // pred_region
      _
    $region13: #{tpu_custom_call.1} parent=1 // pred_fallthru
      _
    // Predicated region
    $region14: #{tpu_custom_call.1} parent=1 // pred_check
      _
    $region15: #{tpu_custom_call.1} parent=1 // pred_check_branch
      %49 = sbr.rel (0) target = $region17
    $region16: #{tpu_custom_call.1} parent=1 // pred_region
      _
    $region17: #{tpu_custom_call.1} parent=1 // pred_fallthru
      _
    // Predicated region
    $region18: #{tpu_custom_call.1} parent=1 // pred_check
      _
    $region19: #{tpu_custom_call.1} parent=1 // pred_check_branch
      %51 = sbr.rel (0) target = $region21
    $region20: #{tpu_custom_call.1} parent=1 // pred_region
      _
    $region21: #{tpu_custom_call.1} parent=1 // pred_fallthru
      _
    // Predicated region
    $region22: #{tpu_custom_call.1} parent=1 // pred_check
      _
    $region23: #{tpu_custom_call.1} parent=1 // pred_check_branch
      %53 = sbr.rel (0) target = $region25
    $region24: #{tpu_custom_call.1} parent=1 // pred_region
      %s55 = ssub.s32 2048, 2048
      %56 = vsyncadd [#allocation7], %s55
      %s57 = sshll.u32 [#allocation8], 4
      %s58 = int_to_ptr.vmem [resolvable:$true] %s57
      %63 = dma.hbm_to_vmem [thread:$0]  %s5, 2048, %s58, [#allocation7], 128, 128, 8
    $region25: #{tpu_custom_call.1} parent=1 // pred_fallthru
      _
    // Predicated region
    $region26: #{tpu_custom_call.1} parent=1 // pred_check
      _
    $region27: #{tpu_custom_call.1} parent=1 // pred_check_branch
      %65 = sbr.rel (0) target = $region29
    $region28: #{tpu_custom_call.1} parent=1 // pred_region
      _
    $region29: #{tpu_custom_call.1} parent=1 // pred_fallthru
      _
    // Predicated region
    $region30: #{tpu_custom_call.1} parent=1 // pred_check
      _
    $region31: #{tpu_custom_call.1} parent=1 // pred_check_branch
      %67 = sbr.rel (0) target = $region33
    $region32: #{tpu_custom_call.1} parent=1 // pred_region
      %68 = dma.done [#allocation4], 256
    $region33: #{tpu_custom_call.1} parent=1 // pred_fallthru
      _
    // Predicated region
    $region34: #{tpu_custom_call.1} parent=1 // pred_check
      _
    $region35: #{tpu_custom_call.1} parent=1 // pred_check_branch
      %70 = sbr.rel (0) target = $region37
    $region36: #{tpu_custom_call.1} parent=1 // pred_region
      %71 = dma.done [#allocation7], 256
    $region37: #{tpu_custom_call.1} parent=1 // pred_fallthru
      _
    // Predicated region
    $region38: #{tpu_custom_call.1} parent=1 // pred_check
      _
    $region39: #{tpu_custom_call.1} parent=1 // pred_check_branch
      %73 = sbr.rel (0) target = $region41
    $region40: #{tpu_custom_call.1} parent=1 // pred_region
      %74 = dma.done [#allocation7], 2048
    $region41: #{tpu_custom_call.1} parent=1 // pred_fallthru
      _
    %s75 = sld [smem:[#allocation2]]
    %v76 = vld [vmem:[#allocation3] sm:$0xff]
    %v77 = vld [vmem:[#allocation3 + $0x8] sm:$0xff]
    %v80 = vcombine.high %v76, %v76
    %v81 = vcombine.high %v77, %v77
    %vm84 = vcmask 1043456
    %v85 = vsel %vm84, %v76, 0.0
    %v86 = vsel %vm84, %v80, 0.0
    %v87 = vadd.f32 %v85, %v86
    %88 = vadd.xlane.f32.xlu0 %v87
    %v89 = vpop.xlane.xlu0 %88
    %v90 = vsel %vm84, %v77, 0.0
    %v91 = vsel %vm84, %v81, 0.0
    %v92 = vadd.f32 %v90, %v91
    %93 = vadd.xlane.f32.xlu0 %v92
    %v94 = vpop.xlane.xlu0 %93
    %v95 = vld [vmem:[#allocation6] sm:$0xff]
    %v96 = vld [vmem:[#allocation6 + $0x8] sm:$0xff]
    %v99 = vcombine.high %v95, %v95
    %v100 = vcombine.high %v96, %v96
    %v103 = vsel %vm84, %v95, 0.0
    %v104 = vsel %vm84, %v99, 0.0
    %v105 = vadd.f32 %v103, %v104
    %106 = vadd.xlane.f32.xlu0 %v105
    %v107 = vpop.xlane.xlu0 %106
    %v108 = vsel %vm84, %v96, 0.0
    %v109 = vsel %vm84, %v100, 0.0
    %v110 = vadd.f32 %v108, %v109
    %111 = vadd.xlane.f32.xlu0 %v110
    %v112 = vpop.xlane.xlu0 %111
    %v115 = vlaneseq
    %v116 = vand.u32 %v115, 127
    %v117 = vlaneseq
    %v118 = vshrl.u32 %v117, 7
    %v119 = vsub.s32 %v116, %v118
    %v120 = vrot.slane %v89, %v119
    %v121 = vlaneseq
    %v122 = vshrl.u32 %v121, 7
    %v123 = vsub.s32 %v116, %v122
    %v124 = vrot.slane %v94, %v123
    %vm125 = vcmask 1041409
    %v126 = vsel %vm125, %v124, %v120
    %v130 = vlaneseq
    %v131 = vshrl.u32 %v130, 7
    %v132 = vsub.s32 %v116, %v131
    %v133 = vrot.slane %v107, %v132
    %v134 = vlaneseq
    %v135 = vshrl.u32 %v134, 7
    %v136 = vsub.s32 %v116, %v135
    %v137 = vrot.slane %v112, %v136
    %vm138 = vcmask 1043459
    %v139 = vsel %vm138, %v137, %v133
    %vm141 = vcmask 1041408
    %v142 = vsel %vm141, %v126, %v139
    %v143 = vld [vmem:[%s2] sm:$0xf]
    %v144 = vld [vmem:[%s3] sm:$0x1]
    %v146 = vlaneseq
    %v147 = vshrl.u32 %v146, 7
    %v148 = vsub.s32 0, %v147
    %v149 = vrot.slane %v144, %v148
    %vm151 = vcmask 31744
    %v153 = vsel %vm151, %v142, 0
    %v156 = vsel %vm84, %v143, 0
    %158 = vmatprep.subr.mxu0 0.0
    %159 = vmatpush1.msra.mxu0 %v156
    %160 = vmatprep.subr.mxu0 0.0
    %161 = vmatpush1.msra.mxu0 0.0
    %162 = vmatprep.subr.mxu0 0.0
    %163 = vmatpush1.msra.mxu0 0.0
    %164 = vmatprep.subr.mxu0 0.0
    %165 = vmatpush1.msra.mxu0 0.0
    %166 = vmatprep.subr.mxu0 0.0
    %167 = vmatpush1.msra.mxu0 0.0
    %168 = vmatprep.subr.mxu0 0.0
    %169 = vmatpush1.msra.mxu0 0.0
    %170 = vmatprep.subr.mxu0 0.0
    %171 = vmatpush1.msra.mxu0 0.0
    %172 = vmatprep.subr.mxu0 0.0
    %173 = vmatpush1.msra.mxu0 0.0
    %174 = vmatprep.subr.mxu0 0.0
    %175 = vmatpush1.msra.mxu0 0.0
    %176 = vmatprep.subr.mxu0 0.0
    %177 = vmatpush1.msra.mxu0 0.0
    %178 = vmatprep.subr.mxu0 0.0
    %179 = vmatpush1.msra.mxu0 0.0
    %180 = vmatprep.subr.mxu0 0.0
    %181 = vmatpush1.msra.mxu0 0.0
    %182 = vmatprep.subr.mxu0 0.0
    %183 = vmatpush1.msra.mxu0 0.0
    %184 = vmatprep.subr.mxu0 0.0
    %185 = vmatpush1.msra.mxu0 0.0
    %186 = vmatprep.subr.mxu0 0.0
    %187 = vmatpush1.msra.mxu0 0.0
    %188 = vmatprep.subr.mxu0 0.0
    %189 = vmatpush1.msra.mxu0 0.0
    %190 = vmatprep.subr.mxu0 0.0
    %191 = vmatpush1.msra.mxu0 0.0
    %192 = vmatprep.subr.mxu0 0.0
    %193 = vmatpush1.msra.mxu0 0.0
    %194 = vmatprep.subr.mxu0 0.0
    %195 = vmatpush1.msra.mxu0 0.0
    %196 = vmatprep.subr.mxu0 0.0
    %197 = vmatpush1.msra.mxu0 0.0
    %198 = vmatprep.subr.mxu0 0.0
    %199 = vmatpush1.msra.mxu0 0.0
    %200 = vmatprep.subr.mxu0 0.0
    %201 = vmatpush1.msra.mxu0 0.0
    %202 = vmatprep.subr.mxu0 0.0
    %203 = vmatpush1.msra.mxu0 0.0
    %204 = vmatprep.subr.mxu0 0.0
    %205 = vmatpush1.msra.mxu0 0.0
    %206 = vmatprep.subr.mxu0 0.0
    %207 = vmatpush1.msra.mxu0 0.0
    %208 = vmatprep.subr.mxu0 0.0
    %209 = vmatpush1.msra.mxu0 0.0
    %210 = vmatprep.subr.mxu0 0.0
    %211 = vmatpush1.msra.mxu0 0.0
    %212 = vmatprep.subr.mxu0 0.0
    %213 = vmatpush1.msra.mxu0 0.0
    %214 = vmatprep.subr.mxu0 0.0
    %215 = vmatpush1.msra.mxu0 0.0
    %216 = vmatprep.subr.mxu0 0.0
    %217 = vmatpush1.msra.mxu0 0.0
    %218 = vmatprep.subr.mxu0 0.0
    %219 = vmatpush1.msra.mxu0 0.0
    %220 = vmatprep.subr.mxu0 0.0
    %221 = vmatpush1.msra.mxu0 0.0
    %222 = vmatprep.mubr.f32.mxu0 0.0
    %223 = vmatmul.mubr.f32.gmra.mrb[0].mxu0 %v153
    %v224 = vpop.f32.mrb[0].mxu0
    %v225 = vadd.f32 %v149, %v224
    %v226 = vpop.f32.mrb[0].mxu0
    %227 = vdwg.mxu0
    %vm228 = vcmp.ge.f32.partialorder %v225, 0.0
    %v229 = vstv %s75
    %v230 = vmul.f32 %v229, %v225
    %v231 = vsel %vm228, %v225, %v230
    %v232 = vld [vmem:[#allocation8] sm:$0xff]
    %v233 = vld [vmem:[#allocation8 + $0x8] sm:$0xff]
    %v234 = vld [vmem:[#allocation8 + $0x10] sm:$0xff]
    %v235 = vld [vmem:[#allocation8 + $0x18] sm:$0xff]
    %v236 = vld [vmem:[#allocation8 + $0x20] sm:$0xff]
    %v237 = vld [vmem:[#allocation8 + $0x28] sm:$0xff]
    %v238 = vld [vmem:[#allocation8 + $0x30] sm:$0xff]
    %v239 = vld [vmem:[#allocation8 + $0x38] sm:$0xff]
    %v240 = vld [vmem:[#allocation8 + $0x40] sm:$0xff]
    %v241 = vld [vmem:[#allocation8 + $0x48] sm:$0xff]
    %v242 = vld [vmem:[#allocation8 + $0x50] sm:$0xff]
    %v243 = vld [vmem:[#allocation8 + $0x58] sm:$0xff]
    %v244 = vld [vmem:[#allocation8 + $0x60] sm:$0xff]
    %v245 = vld [vmem:[#allocation8 + $0x68] sm:$0xff]
    %v246 = vld [vmem:[#allocation8 + $0x70] sm:$0xff]
    %v247 = vld [vmem:[#allocation8 + $0x78] sm:$0xff]
    %v248 = vld [vmem:[%s6] sm:$0x1]
    %v250 = vlaneseq
    %v251 = vshrl.u32 %v250, 7
    %v252 = vsub.s32 0, %v251
    %v253 = vrot.slane %v248, %v252
    %255 = vmatprep.subr.mxu0 0.0
    %256 = vmatpush1.msra.mxu0 %v232
    %257 = vmatprep.subr.mxu0 0.0
    %258 = vmatpush1.msra.mxu0 %v233
    %259 = vmatprep.subr.mxu0 0.0
    %260 = vmatpush1.msra.mxu0 %v234
    %261 = vmatprep.subr.mxu0 0.0
    %262 = vmatpush1.msra.mxu0 %v235
    %263 = vmatprep.subr.mxu0 0.0
    %264 = vmatpush1.msra.mxu0 %v236
    %265 = vmatprep.subr.mxu0 0.0
    %266 = vmatpush1.msra.mxu0 %v237
    %267 = vmatprep.subr.mxu0 0.0
    %268 = vmatpush1.msra.mxu0 %v238
    %269 = vmatprep.subr.mxu0 0.0
    %270 = vmatpush1.msra.mxu0 %v239
    %271 = vmatprep.subr.mxu0 0.0
    %272 = vmatpush1.msra.mxu0 %v240
    %273 = vmatprep.subr.mxu0 0.0
    %274 = vmatpush1.msra.mxu0 %v241
    %275 = vmatprep.subr.mxu0 0.0
    %276 = vmatpush1.msra.mxu0 %v242
    %277 = vmatprep.subr.mxu0 0.0
    %278 = vmatpush1.msra.mxu0 %v243
    %279 = vmatprep.subr.mxu0 0.0
    %280 = vmatpush1.msra.mxu0 %v244
    %281 = vmatprep.subr.mxu0 0.0
    %282 = vmatpush1.msra.mxu0 %v245
    %283 = vmatprep.subr.mxu0 0.0
    %284 = vmatpush1.msra.mxu0 %v246
    %285 = vmatprep.subr.mxu0 0.0
    %286 = vmatpush1.msra.mxu0 %v247
    %287 = vmatprep.subr.mxu0 0.0
    %288 = vmatpush1.msra.mxu0 0.0
    %289 = vmatprep.subr.mxu0 0.0
    %290 = vmatpush1.msra.mxu0 0.0
    %291 = vmatprep.subr.mxu0 0.0
    %292 = vmatpush1.msra.mxu0 0.0
    %293 = vmatprep.subr.mxu0 0.0
    %294 = vmatpush1.msra.mxu0 0.0
    %295 = vmatprep.subr.mxu0 0.0
    %296 = vmatpush1.msra.mxu0 0.0
    %297 = vmatprep.subr.mxu0 0.0
    %298 = vmatpush1.msra.mxu0 0.0
    %299 = vmatprep.subr.mxu0 0.0
    %300 = vmatpush1.msra.mxu0 0.0
    %301 = vmatprep.subr.mxu0 0.0
    %302 = vmatpush1.msra.mxu0 0.0
    %303 = vmatprep.subr.mxu0 0.0
    %304 = vmatpush1.msra.mxu0 0.0
    %305 = vmatprep.subr.mxu0 0.0
    %306 = vmatpush1.msra.mxu0 0.0
    %307 = vmatprep.subr.mxu0 0.0
    %308 = vmatpush1.msra.mxu0 0.0
    %309 = vmatprep.subr.mxu0 0.0
    %310 = vmatpush1.msra.mxu0 0.0
    %311 = vmatprep.subr.mxu0 0.0
    %312 = vmatpush1.msra.mxu0 0.0
    %313 = vmatprep.subr.mxu0 0.0
    %314 = vmatpush1.msra.mxu0 0.0
    %315 = vmatprep.subr.mxu0 0.0
    %316 = vmatpush1.msra.mxu0 0.0
    %317 = vmatprep.subr.mxu0 0.0
    %318 = vmatpush1.msra.mxu0 0.0
    %319 = vmatprep.mubr.f32.mxu0 0.0
    %320 = vmatmul.mubr.f32.gmra.mrb[0].mxu0 %v231
    %v321 = vpop.f32.mrb[0].mxu0
    %v322 = vadd.f32 %v253, %v321
    %v323 = vpop.f32.mrb[0].mxu0
    %324 = vdwg.mxu0
    %325 = vst [vmem:[#allocation9] sm:$0x3] %v231
    %326 = vst [vmem:[#allocation10 - $0x2] sm:$0xc] %v231
    %327 = vst [vmem:[#allocation12] sm:$0x3] %v322
    %328 = vst [vmem:[#allocation13 - $0x2] sm:$0xc] %v322
    // Predicated region
    $region42: #{tpu_custom_call.1} parent=1 // pred_check
      _
    $region43: #{tpu_custom_call.1} parent=1 // pred_check_branch
      %330 = sbr.rel (0) target = $region45
    $region44: #{tpu_custom_call.1} parent=1 // pred_region
      %s332 = ssub.s32 32, 32
      %333 = vsyncadd [#allocation5], %s332
      %s335 = sshll.u32 [#allocation9], 4
      %s336 = int_to_ptr.vmem [resolvable:$true] %s335
      %338 = dma.vmem_to_hbm [thread:$0]  %s336, 32, %s7, [#allocation5]
    $region45: #{tpu_custom_call.1} parent=1 // pred_fallthru
      _
    // Predicated region
    $region46: #{tpu_custom_call.1} parent=1 // pred_check
      _
    $region47: #{tpu_custom_call.1} parent=1 // pred_check_branch
      %340 = sbr.rel (0) target = $region49
    $region48: #{tpu_custom_call.1} parent=1 // pred_region
      %s342 = ssub.s32 32, 32
      %343 = vsyncadd [#allocation11], %s342
      %s345 = sshll.u32 [#allocation10], 4
      %s346 = int_to_ptr.vmem [resolvable:$true] %s345
      %348 = dma.vmem_to_hbm [thread:$0]  %s346, 32, %s8, [#allocation11]
    $region49: #{tpu_custom_call.1} parent=1 // pred_fallthru
      _
    // Predicated region
    $region50: #{tpu_custom_call.1} parent=1 // pred_check
      _
    $region51: #{tpu_custom_call.1} parent=1 // pred_check_branch
      %350 = sbr.rel (0) target = $region53
    $region52: #{tpu_custom_call.1} parent=1 // pred_region
      %s352 = ssub.s32 32, 32
      %353 = vsyncadd [#allocation11], %s352
      %s355 = sshll.u32 [#allocation12], 4
      %s356 = int_to_ptr.vmem [resolvable:$true] %s355
      %358 = dma.vmem_to_hbm [thread:$0]  %s356, 32, %s9, [#allocation11]
    $region53: #{tpu_custom_call.1} parent=1 // pred_fallthru
      _
    // Predicated region
    $region54: #{tpu_custom_call.1} parent=1 // pred_check
      _
    $region55: #{tpu_custom_call.1} parent=1 // pred_check_branch
      %360 = sbr.rel (0) target = $region57
    $region56: #{tpu_custom_call.1} parent=1 // pred_region
      %s362 = ssub.s32 32, 32
      %363 = vsyncadd [#allocation14], %s362
      %s365 = sshll.u32 [#allocation13], 4
      %s366 = int_to_ptr.vmem [resolvable:$true] %s365
      %368 = dma.vmem_to_hbm [thread:$0]  %s366, 32, %s10, [#allocation14]
    $region57: #{tpu_custom_call.1} parent=1 // pred_fallthru
      _
    // Predicated region
    $region58: #{tpu_custom_call.1} parent=1 // pred_check
      _
    $region59: #{tpu_custom_call.1} parent=1 // pred_check_branch
      %370 = sbr.rel (0) target = $region61
    $region60: #{tpu_custom_call.1} parent=1 // pred_region
      %371 = dma.done [#allocation5], 32
    $region61: #{tpu_custom_call.1} parent=1 // pred_fallthru
      _
    // Predicated region
    $region62: #{tpu_custom_call.1} parent=1 // pred_check
      _
    $region63: #{tpu_custom_call.1} parent=1 // pred_check_branch
      %373 = sbr.rel (0) target = $region65
    $region64: #{tpu_custom_call.1} parent=1 // pred_region
      %374 = dma.done [#allocation11], 32
    $region65: #{tpu_custom_call.1} parent=1 // pred_fallthru
      _
    // Predicated region
    $region66: #{tpu_custom_call.1} parent=1 // pred_check
      _
    $region67: #{tpu_custom_call.1} parent=1 // pred_check_branch
      %376 = sbr.rel (0) target = $region69
    $region68: #{tpu_custom_call.1} parent=1 // pred_region
      %377 = dma.done [#allocation11], 32
    $region69: #{tpu_custom_call.1} parent=1 // pred_fallthru
      _
    // Predicated region
    $region70: #{tpu_custom_call.1} parent=1 // pred_check
      _
    $region71: #{tpu_custom_call.1} parent=1 // pred_check_branch
      %379 = sbr.rel (0) target = $region73
    $region72: #{tpu_custom_call.1} parent=1 // pred_region
      %380 = dma.done [#allocation14], 32
    $region73: #{tpu_custom_call.1} parent=1 // pred_fallthru
      _
    %381 = vsyncpa [#allocation4], 1
    %382 = vsyncpa [#allocation7], 1
    %383 = vsyncpa [#allocation5], 1
    %384 = vsyncpa [#allocation11], 1
    %385 = vsyncpa [#allocation14], 1

</llo_original>
